<compile_context>
chip_gen: v6e
topology: v6e:2x2x1
jax: 0.10.0
libtpu: 0.0.40
codegen_flags: <defaults>
</compile_context>

<pallas_src>
import jax
import jax.numpy as jnp
import numpy as np
from jax.experimental import pallas as pl
from jax.experimental.pallas import tpu as pltpu


# ------------------------------- helpers -------------------------------------

def _round_up(v, m):
    return ((v + m - 1) // m) * m


def _pick_t_blk(seq_len, max_blk=16):
    # largest divisor of seq_len not exceeding max_blk
    for cand in range(min(max_blk, seq_len), 0, -1):
        if seq_len % cand == 0:
            return cand
    return 1


_VMEM_LIMIT = 32 * 1024 * 1024


# ------------------------ input-projection kernel ----------------------------

def _proj_kernel(x_ref, w_ref, b_ref, gi_ref):
    # x_ref: (T_BLK*Bp, X) bf16, w_ref: (X, G*Hp) bf16, b_ref: (1, G*Hp) f32
    gi_ref[...] = (jnp.dot(x_ref[...], w_ref[...],
                           preferred_element_type=jnp.float32)
                   + b_ref[...])


def _input_projection(x2d_bf16, wih_t_bf16, bias_f32, t_blk, Bp):
    SB, X = x2d_bf16.shape
    GHp = wih_t_bf16.shape[1]
    rows = t_blk * Bp
    n_blk = SB // rows
    return pl.pallas_call(
        _proj_kernel,
        grid=(n_blk,),
        in_specs=[pl.BlockSpec((rows, X), lambda i: (i, 0)),
                  pl.BlockSpec((X, GHp), lambda i: (0, 0)),
                  pl.BlockSpec((1, GHp), lambda i: (0, 0))],
        out_specs=pl.BlockSpec((rows, GHp), lambda i: (i, 0)),
        out_shape=jax.ShapeDtypeStruct((SB, GHp), jnp.float32),
        compiler_params=pltpu.CompilerParams(
            dimension_semantics=("parallel",),
            vmem_limit_bytes=_VMEM_LIMIT),
    )(x2d_bf16, wih_t_bf16, bias_f32)


# ---------------------------- recurrent kernels -------------------------------

def _simple_rec_kernel(gi_ref, h0_ref, whh_t_ref, out_ref, h_scr):
    tb = pl.program_id(0)
    Bp, _ = h_scr.shape
    t_blk = gi_ref.shape[0] // Bp

    @pl.when(tb == 0)
    def _():
        h_scr[...] = h0_ref[...].astype(jnp.float32)

    def step(i, carry):
        r0 = pl.multiple_of(i * Bp, Bp)
        h_prev = h_scr[...]
        g = gi_ref[pl.ds(r0, Bp), :] + jnp.dot(
            h_prev.astype(jnp.bfloat16), whh_t_ref[...],
            preferred_element_type=jnp.float32)
        h_new = jnp.tanh(g)
        h_scr[...] = h_new
        out_ref[pl.ds(r0, Bp), :] = h_new.astype(out_ref.dtype)
        return carry

    jax.lax.fori_loop(0, t_blk, step, 0, unroll=True)


def _gru_rec_kernel(gi_ref, h0_ref, whh_t_ref, bhh_ref, out_ref, h_scr):
    tb = pl.program_id(0)
    Bp, Hp = h_scr.shape
    t_blk = gi_ref.shape[0] // Bp

    @pl.when(tb == 0)
    def _():
        h_scr[...] = h0_ref[...].astype(jnp.float32)

    def step(i, carry):
        r0 = pl.multiple_of(i * Bp, Bp)
        h_prev = h_scr[...]
        gi = gi_ref[pl.ds(r0, Bp), :]                     # has b_ih already
        gh = jnp.dot(h_prev.astype(jnp.bfloat16), whh_t_ref[...],
                     preferred_element_type=jnp.float32) + bhh_ref[...]
        r = jax.nn.sigmoid(gi[:, 0:Hp] + gh[:, 0:Hp])
        z = jax.nn.sigmoid(gi[:, Hp:2 * Hp] + gh[:, Hp:2 * Hp])
        n = jnp.tanh(gi[:, 2 * Hp:3 * Hp] + r * gh[:, 2 * Hp:3 * Hp])
        h_new = (1.0 - z) * n + z * h_prev
        h_scr[...] = h_new
        out_ref[pl.ds(r0, Bp), :] = h_new.astype(out_ref.dtype)
        return carry

    jax.lax.fori_loop(0, t_blk, step, 0, unroll=True)


def _lstm_rec_kernel(gi_ref, h0_ref, c0_ref, whh_t_ref, out_ref, cn_ref,
                     h_scr, c_scr):
    tb = pl.program_id(0)
    Bp, Hp = h_scr.shape
    t_blk = gi_ref.shape[0] // Bp

    @pl.when(tb == 0)
    def _():
        h_scr[...] = h0_ref[...].astype(jnp.float32)
        c_scr[...] = c0_ref[...].astype(jnp.float32)

    def step(i, carry):
        r0 = pl.multiple_of(i * Bp, Bp)
        h_prev = h_scr[...]
        c_prev = c_scr[...]
        g = gi_ref[pl.ds(r0, Bp), :] + jnp.dot(
            h_prev.astype(jnp.bfloat16), whh_t_ref[...],
            preferred_element_type=jnp.float32)
        i_g = jax.nn.sigmoid(g[:, 0:Hp])
        f_g = jax.nn.sigmoid(g[:, Hp:2 * Hp])
        g_g = jnp.tanh(g[:, 2 * Hp:3 * Hp])
        o_g = jax.nn.sigmoid(g[:, 3 * Hp:4 * Hp])
        c_new = f_g * c_prev + i_g * g_g
        h_new = o_g * jnp.tanh(c_new)
        h_scr[...] = h_new
        c_scr[...] = c_new
        out_ref[pl.ds(r0, Bp), :] = h_new.astype(out_ref.dtype)
        return carry

    jax.lax.fori_loop(0, t_blk, step, 0, unroll=True)

    @pl.when(tb == pl.num_programs(0) - 1)
    def _():
        cn_ref[...] = c_scr[...].astype(cn_ref.dtype)


# ------------------------------- wrapper --------------------------------------

def rnn_forward(x, h, params, rnn_algo, max_t_blk=16):
    seq_len, B, X = x.shape
    H = params["w_hh"].shape[1]
    G = {"Simple": 1, "GRU": 3, "LSTM": 4}[rnn_algo]

    Bp = _round_up(B, 8)          # sublane alignment
    Hp = _round_up(H, 128)        # lane alignment (also aligns each gate slice)
    GHp = G * Hp
    t_blk = _pick_t_blk(seq_len, max_t_blk)
    n_blk = seq_len // t_blk
    rows = t_blk * Bp

    # --- repack weights/biases gate-blocked with per-gate padding to Hp -------
    def pad_gate_cols(a):  # (..., G*H) -> (..., G*Hp), zeros in padded lanes
        parts = []
        for g in range(G):
            blk = a[..., g * H:(g + 1) * H]
            pw = [(0, 0)] * (a.ndim - 1) + [(0, Hp - H)]
            parts.append(jnp.pad(blk, pw))
        return jnp.concatenate(parts, axis=-1)

    wih_t = pad_gate_cols(params["w_ih"].T)                                  # (X, G*Hp)
    whh_t = pad_gate_cols(jnp.pad(params["w_hh"].T, ((0, Hp - H), (0, 0))))  # (Hp, G*Hp)
    b_ih = pad_gate_cols(params["b_ih"][None, :])                            # (1, G*Hp)
    b_hh = pad_gate_cols(params["b_hh"][None, :])                            # (1, G*Hp)

    wih_t_bf = wih_t.astype(jnp.bfloat16)
    whh_t_bf = whh_t.astype(jnp.bfloat16)

    # --- pad inputs / initial state -------------------------------------------
    x2d = jnp.pad(x, ((0, 0), (0, Bp - B), (0, 0))).astype(
        jnp.bfloat16).reshape(seq_len * Bp, X)

    if rnn_algo == "LSTM":
        h0_in, c0_in = h
    else:
        h0_in = h
    h0 = jnp.pad(h0_in[0], ((0, Bp - B), (0, Hp - H))).astype(jnp.float32)

    cparams = pltpu.CompilerParams(dimension_semantics=("arbitrary",),
                                   vmem_limit_bytes=_VMEM_LIMIT)

    gi_spec = pl.BlockSpec((rows, GHp), lambda i: (i, 0))
    out_spec = pl.BlockSpec((rows, Hp), lambda i: (i, 0))
    h0_spec = pl.BlockSpec((Bp, Hp), lambda i: (0, 0))
    whh_spec = pl.BlockSpec((Hp, GHp), lambda i: (0, 0))
    bias_spec = pl.BlockSpec((1, GHp), lambda i: (0, 0))
    state_out_spec = pl.BlockSpec((Bp, Hp), lambda i: (0, 0))

    def unpad(out2d):
        out3 = out2d.reshape(seq_len, Bp, Hp)
        out = out3[:, :B, :H]
        hn = out3[seq_len - 1, :B, :H][None]
        return out, hn

    if rnn_algo == "Simple":
        gi = _input_projection(x2d, wih_t_bf, b_ih + b_hh, t_blk, Bp)
        out2d = pl.pallas_call(
            _simple_rec_kernel,
            grid=(n_blk,),
            in_specs=[gi_spec, h0_spec, whh_spec],
            out_specs=out_spec,
            out_shape=jax.ShapeDtypeStruct((seq_len * Bp, Hp), x.dtype),
            scratch_shapes=[pltpu.VMEM((Bp, Hp), jnp.float32)],
            compiler_params=cparams,
        )(gi, h0, whh_t_bf)
        out, hn = unpad(out2d)
        return out, hn

    if rnn_algo == "GRU":
        gi = _input_projection(x2d, wih_t_bf, b_ih, t_blk, Bp)
        out2d = pl.pallas_call(
            _gru_rec_kernel,
            grid=(n_blk,),
            in_specs=[gi_spec, h0_spec, whh_spec, bias_spec],
            out_specs=out_spec,
            out_shape=jax.ShapeDtypeStruct((seq_len * Bp, Hp), x.dtype),
            scratch_shapes=[pltpu.VMEM((Bp, Hp), jnp.float32)],
            compiler_params=cparams,
        )(gi, h0, whh_t_bf, b_hh)
        out, hn = unpad(out2d)
        return out, hn

    if rnn_algo == "LSTM":
        c0 = jnp.pad(c0_in[0], ((0, Bp - B), (0, Hp - H))).astype(jnp.float32)
        gi = _input_projection(x2d, wih_t_bf, b_ih + b_hh, t_blk, Bp)
        out2d, cn_pad = pl.pallas_call(
            _lstm_rec_kernel,
            grid=(n_blk,),
            in_specs=[gi_spec, h0_spec, h0_spec, whh_spec],
            out_specs=(out_spec, state_out_spec),
            out_shape=(jax.ShapeDtypeStruct((seq_len * Bp, Hp), x.dtype),
                       jax.ShapeDtypeStruct((Bp, Hp), jnp.float32)),
            scratch_shapes=[pltpu.VMEM((Bp, Hp), jnp.float32),
                            pltpu.VMEM((Bp, Hp), jnp.float32)],
            compiler_params=cparams,
        )(gi, h0, c0, whh_t_bf)
        out, hn = unpad(out2d)
        cn = cn_pad[:B, :H][None]
        return out, (hn, cn)

    raise NotImplementedError(rnn_algo)


# ------------------------- params / reference --------------------------------

def init_params(key, x_dim, h_dim, rnn_algo):
    gates = {"Simple": 1, "GRU": 3, "LSTM": 4}[rnn_algo]
    k = 1.0 / np.sqrt(h_dim)   # PyTorch default init U(-1/sqrt(H), 1/sqrt(H))
    keys = jax.random.split(key, 4)
    shapes = [(gates * h_dim, x_dim), (gates * h_dim, h_dim),
              (gates * h_dim,), (gates * h_dim,)]
    names = ["w_ih", "w_hh", "b_ih", "b_hh"]
    return {n: jax.random.uniform(kk, s, jnp.float32, -k, k)
            for n, kk, s in zip(names, keys, shapes)}


def ref_forward(x, h, params, rnn_algo):
    H = params["w_hh"].shape[1]
    wih_t, whh_t = params["w_ih"].T, params["w_hh"].T
    bih, bhh = params["b_ih"], params["b_hh"]

    if rnn_algo == "Simple":
        def step(hh, x_t):
            h_new = jnp.tanh(x_t @ wih_t + hh @ whh_t + bih + bhh)
            return h_new, h_new
        h_last, ys = jax.lax.scan(step, h[0], x)
        return ys, h_last[None]

    if rnn_algo == "GRU":
        def step(hh, x_t):
            gi = x_t @ wih_t + bih
            gh = hh @ whh_t + bhh
            r = jax.nn.sigmoid(gi[:, :H] + gh[:, :H])
            z = jax.nn.sigmoid(gi[:, H:2 * H] + gh[:, H:2 * H])
            n = jnp.tanh(gi[:, 2 * H:] + r * gh[:, 2 * H:])
            h_new = (1.0 - z) * n + z * hh
            return h_new, h_new
        h_last, ys = jax.lax.scan(step, h[0], x)
        return ys, h_last[None]

    if rnn_algo == "LSTM":
        def step(carry, x_t):
            hh, cc = carry
            g = x_t @ wih_t + hh @ whh_t + bih + bhh
            i = jax.nn.sigmoid(g[:, :H])
            f = jax.nn.sigmoid(g[:, H:2 * H])
            gg = jnp.tanh(g[:, 2 * H:3 * H])
            o = jax.nn.sigmoid(g[:, 3 * H:])
            c_new = f * cc + i * gg
            h_new = o * jnp.tanh(c_new)
            return (h_new, c_new), h_new
        (h_last, c_last), ys = jax.lax.scan(step, (h[0][0], h[1][0]), x)
        return ys, (h_last[None], c_last[None])

    raise NotImplementedError(rnn_algo)


# --------------------------------- main ---------------------------------------

if __name__ == "__main__":
    seq_len, batch, x_dim, h_dim = 8, 4, 16, 32
    root = jax.random.PRNGKey(0)
    kx, kp = jax.random.split(root, 2)
    x = jax.random.normal(kx, (seq_len, batch, x_dim), jnp.float32)

    for idx, algo in enumerate(("Simple", "GRU", "LSTM")):
        params = init_params(jax.random.fold_in(kp, idx), x_dim, h_dim, algo)
        if algo == "LSTM":
            h0 = (jnp.zeros((1, batch, h_dim), jnp.float32),
                  jnp.zeros((1, batch, h_dim), jnp.float32))
        else:
            h0 = jnp.zeros((1, batch, h_dim), jnp.float32)

        out, hn = rnn_forward(x, h0, params, algo)
        jax.block_until_ready(out)

        ref_out, ref_hn = ref_forward(x, h0, params, algo)
        # bf16 MXU operands with f32 accumulation -> slightly looser tolerance
        np.testing.assert_allclose(np.asarray(out), np.asarray(ref_out),
                                   atol=2e-2, rtol=2e-2)
        if algo == "LSTM":
            np.testing.assert_allclose(np.asarray(hn[0]), np.asarray(ref_hn[0]),
                                       atol=2e-2, rtol=2e-2)
            np.testing.assert_allclose(np.asarray(hn[1]), np.asarray(ref_hn[1]),
                                       atol=2e-2, rtol=2e-2)
        else:
            np.testing.assert_allclose(np.asarray(hn), np.asarray(ref_hn),
                                       atol=2e-2, rtol=2e-2)

    print("KERNEL_OK")
</pallas_src>

<mosaic_0001>
module attributes {stable_mosaic.version = 11 : i64} {
  func.func @_proj_kernel(%arg0: i32, %arg1: memref<64x16xbf16, #tpu.memory_space<vmem>>, %arg2: memref<16x128xbf16, #tpu.memory_space<vmem>>, %arg3: memref<1x128xf32, #tpu.memory_space<vmem>>, %arg4: memref<64x128xf32, #tpu.memory_space<vmem>>) attributes {dimension_semantics = [#tpu.dimension_semantics<parallel>], iteration_bounds = array<i64: 1>, scalar_prefetch = 0 : i64, scratch_operands = 0 : i64, tpu.core_type = #tpu.core_type<tc>, window_params = [{transform_indices = @transform_0, window_bounds = array<i64: 64, 16>}, {pipeline_mode = #tpu.pipeline_mode<synchronous>, transform_indices = @transform_1, window_bounds = array<i64: 16, 128>}, {pipeline_mode = #tpu.pipeline_mode<synchronous>, transform_indices = @transform_2, window_bounds = array<i64: 1, 128>}, {transform_indices = @transform_3, window_bounds = array<i64: 64, 128>}]} {
    %c0 = arith.constant 0 : index
    %c0_0 = arith.constant 0 : index
    %0 = vector.load %arg1[%c0, %c0_0] : memref<64x16xbf16, #tpu.memory_space<vmem>>, vector<64x16xbf16>
    %c0_1 = arith.constant 0 : index
    %c0_2 = arith.constant 0 : index
    %1 = vector.load %arg2[%c0_1, %c0_2] : memref<16x128xbf16, #tpu.memory_space<vmem>>, vector<16x128xbf16>
    %cst = arith.constant dense<0.000000e+00> : vector<64x128xf32>
    %2 = tpu.matmul %0, %1, %cst {dimension_numbers = #tpu.dot_dimension_numbers<[1], [0], [0], [1], [0, 0, 1, 1], [], []>} : vector<64x16xbf16>, vector<16x128xbf16>, vector<64x128xf32> -> vector<64x128xf32>
    %c0_3 = arith.constant 0 : index
    %c0_4 = arith.constant 0 : index
    %3 = vector.load %arg3[%c0_3, %c0_4] : memref<1x128xf32, #tpu.memory_space<vmem>>, vector<1x128xf32>
    %4 = vector.broadcast %3 : vector<1x128xf32> to vector<64x128xf32>
    %5 = arith.addf %2, %4 : vector<64x128xf32>
    %c0_5 = arith.constant 0 : index
    %c0_6 = arith.constant 0 : index
    %6 = vector.load %arg4[%c0_5, %c0_6] : memref<64x128xf32, #tpu.memory_space<vmem>>, vector<64x128xf32>
    tpu.vector_store %arg4[%c0_5, %c0_6], %5 {strides = array<i32>} : memref<64x128xf32, #tpu.memory_space<vmem>>, vector<64x128xf32>,
    return
  }
  func.func @transform_0(%arg0: i32) -> (i32, i32) {
    %c0_i32 = arith.constant 0 : i32
    %c0_i32_0 = arith.constant 0 : i32
    return %arg0, %c0_i32 : i32, i32
  }
  func.func @transform_1(%arg0: i32) -> (i32, i32) {
    %c0_i32 = arith.constant 0 : i32
    %c0_i32_0 = arith.constant 0 : i32
    %c0_i32_1 = arith.constant 0 : i32
    return %c0_i32, %c0_i32_0 : i32, i32
  }
  func.func @transform_2(%arg0: i32) -> (i32, i32) {
    %c0_i32 = arith.constant 0 : i32
    %c0_i32_0 = arith.constant 0 : i32
    %c0_i32_1 = arith.constant 0 : i32
    return %c0_i32, %c0_i32_0 : i32, i32
  }
  func.func @transform_3(%arg0: i32) -> (i32, i32) {
    %c0_i32 = arith.constant 0 : i32
    %c0_i32_0 = arith.constant 0 : i32
    return %arg0, %c0_i32 : i32, i32
  }
}

</mosaic_0001>

<llo_original>
// kernel: tpu_custom_call.1
$region0: #{tpu_custom_call.1}
  #allocation0 [shape = 'u32[]', space=smem, size = 0x4, offset = 0x4, fixed_abs, tag = 'smem constant byte address 0x4 - core index']
  #allocation1 [shape = 'u32[144,128]{1,0:T(1,128)}', space=vmem, size = 0x12000, scoped, tag = 'internal scratch']
  %s0 = inlined_call_operand.vmem [shape: bf16[64,16], index: 0, kind: input, shape index: {}]
  %s1 = inlined_call_operand.vmem [shape: bf16[16,128], index: 1, kind: input, shape index: {}]
  %s2 = inlined_call_operand.vmem [shape: f32[1,128], index: 2, kind: input, shape index: {}]
  %s3 = inlined_call_operand.hbm [shape: f32[64,128], index: 3, kind: output, shape index: {}]
  %s4 = sld [smem:[#allocation0]]
  $region22: #{tpu_custom_call.1} parent=0
    _
  %s6 = ssub.s32 1, %s4
  %s7 = scalar_select 0, %s6, %s4
  $region1: #{tpu_custom_call.1} parent=0
    #allocation2 [shape = 'u8[32768]{0}', space=vmem, size = 0x8000, scoped, tag = 'output window, operand 0, single buffered']
    #allocation3 [shape = 's32[1]{0}', space=sflag, size = 0x4, scoped, tag = 'scoped memory for tpu_custom_call.1']
    %8 = vsyncpa [#allocation3], 0
    // Predicated region
    $region2: #{tpu_custom_call.1} parent=1 // pred_check
      _
    $region3: #{tpu_custom_call.1} parent=1 // pred_check_branch
      %10 = sbr.rel (0) target = $region5
    $region4: #{tpu_custom_call.1} parent=1 // pred_region
      _
    $region5: #{tpu_custom_call.1} parent=1 // pred_fallthru
      _
    // Predicated region
    $region6: #{tpu_custom_call.1} parent=1 // pred_check
      _
    $region7: #{tpu_custom_call.1} parent=1 // pred_check_branch
      %12 = sbr.rel (0) target = $region9
    $region8: #{tpu_custom_call.1} parent=1 // pred_region
      _
    $region9: #{tpu_custom_call.1} parent=1 // pred_fallthru
      _
    // Predicated region
    $region10: #{tpu_custom_call.1} parent=1 // pred_check
      _
    $region11: #{tpu_custom_call.1} parent=1 // pred_check_branch
      %14 = sbr.rel (0) target = $region13
    $region12: #{tpu_custom_call.1} parent=1 // pred_region
      _
    $region13: #{tpu_custom_call.1} parent=1 // pred_fallthru
      _
    %v16 = vld [vmem:[%s0] sm:$0xf]
    %v17 = vld [vmem:[%s0 + $0x4] sm:$0xf]
    %v18 = vld [vmem:[%s0 + $0x8] sm:$0xf]
    %v19 = vld [vmem:[%s0 + $0xc] sm:$0xf]
    %v20 = vld [vmem:[%s0 + $0x10] sm:$0xf]
    %v21 = vld [vmem:[%s0 + $0x14] sm:$0xf]
    %v22 = vld [vmem:[%s0 + $0x18] sm:$0xf]
    %v23 = vld [vmem:[%s0 + $0x1c] sm:$0xf]
    %v24 = vld [vmem:[%s1] sm:$0xf]
    %v25 = vld [vmem:[%s1 + $0x4] sm:$0xf]
    %v26 = vld [vmem:[%s2] sm:$0x1]
    %v28 = vlaneseq
    %v29 = vshrl.u32 %v28, 7
    %v30 = vsub.s32 0, %v29
    %v31 = vrot.slane %v26, %v30
    %v41 = vunpack.c.l.b16 %v16
    %v42 = vunpack.c.l.b16 %v17
    %v43 = vunpack.c.l.b16 %v18
    %v44 = vunpack.c.l.b16 %v19
    %v45 = vunpack.c.l.b16 %v20
    %v46 = vunpack.c.l.b16 %v21
    %v47 = vunpack.c.l.b16 %v22
    %v48 = vunpack.c.l.b16 %v23
    %v49 = vpack.c.b16 %v42, %v41
    %v50 = vpack.c.b16 %v44, %v43
    %v51 = vpack.c.b16 %v46, %v45
    %v52 = vpack.c.b16 %v48, %v47
    %v55 = vunpack.c.l.b16 %v24
    %v56 = vunpack.c.l.b16 %v25
    %v57 = vpack.c.b16 %v56, %v55
    %vm59 = vcmask 130048
    %v61 = vsel %vm59, %v49, 0
    %v64 = vsel %vm59, %v50, 0
    %v67 = vsel %vm59, %v51, 0
    %v70 = vsel %vm59, %v52, 0
    %72 = vmatprep.subr.bf16.mxu0 0
    %73 = vmatpush1.bf16.msra.mxu0 0
    %74 = vmatprep.subr.bf16.mxu0 0
    %75 = vmatpush1.bf16.msra.mxu0 0
    %76 = vmatprep.subr.bf16.mxu0 0
    %77 = vmatpush1.bf16.msra.mxu0 0
    %78 = vmatprep.subr.bf16.mxu0 0
    %79 = vmatpush1.bf16.msra.mxu0 0
    %80 = vmatprep.subr.bf16.mxu0 0
    %81 = vmatpush1.bf16.msra.mxu0 0
    %82 = vmatprep.subr.bf16.mxu0 0
    %83 = vmatpush1.bf16.msra.mxu0 0
    %84 = vmatprep.subr.bf16.mxu0 0
    %85 = vmatpush1.bf16.msra.mxu0 0
    %86 = vmatprep.subr.bf16.mxu0 0
    %87 = vmatpush1.bf16.msra.mxu0 %v57
    %88 = vmatprep.subr.bf16.mxu0 0
    %89 = vmatpush2.bf16.msra.mxu0 0
    %90 = vmatprep.subr.bf16.mxu0 0
    %91 = vmatpush2.bf16.msra.mxu0 0
    %92 = vmatprep.subr.bf16.mxu0 0
    %93 = vmatpush2.bf16.msra.mxu0 0
    %94 = vmatprep.subr.bf16.mxu0 0
    %95 = vmatpush2.bf16.msra.mxu0 0
    %96 = vmatprep.subr.bf16.mxu0 0
    %97 = vmatpush2.bf16.msra.mxu0 0
    %98 = vmatprep.subr.bf16.mxu0 0
    %99 = vmatpush2.bf16.msra.mxu0 0
    %100 = vmatprep.subr.bf16.mxu0 0
    %101 = vmatpush2.bf16.msra.mxu0 0
    %102 = vmatprep.subr.bf16.mxu0 0
    %103 = vmatpush2.bf16.msra.mxu0 0
    %104 = vmatprep.mubr.bf16.mxu0 0
    %105 = vmatmul.mubr.bf16.gmra.mxu0 %v61
    %v106 = vpop.f32.mrf.mxu0
    %v107 = vadd.f32 %v31, %v106
    %v108 = vpop.f32.mrf.mxu0
    %v109 = vpop.f32.mrf.mxu0
    %v110 = vadd.f32 %v31, %v109
    %v111 = vpop.f32.mrf.mxu0
    %112 = vmatprep.mubr.bf16.mxu0 0
    %113 = vmatmul.mubr.bf16.gmra.mxu0 %v64
    %v114 = vpop.f32.mrf.mxu0
    %v115 = vadd.f32 %v31, %v114
    %v116 = vpop.f32.mrf.mxu0
    %v117 = vpop.f32.mrf.mxu0
    %v118 = vadd.f32 %v31, %v117
    %v119 = vpop.f32.mrf.mxu0
    %120 = vmatprep.mubr.bf16.mxu0 0
    %121 = vmatmul.mubr.bf16.gmra.mxu0 %v67
    %v122 = vpop.f32.mrf.mxu0
    %v123 = vadd.f32 %v31, %v122
    %v124 = vpop.f32.mrf.mxu0
    %v125 = vpop.f32.mrf.mxu0
    %v126 = vadd.f32 %v31, %v125
    %v127 = vpop.f32.mrf.mxu0
    %128 = vmatprep.mubr.bf16.mxu0 0
    %129 = vmatmul.mubr.bf16.gmra.mxu0 %v70
    %v130 = vpop.f32.mrf.mxu0
    %v131 = vadd.f32 %v31, %v130
    %v132 = vpop.f32.mrf.mxu0
    %v133 = vpop.f32.mrf.mxu0
    %v134 = vadd.f32 %v31, %v133
    %v135 = vpop.f32.mrf.mxu0
    %136 = vdwg.mxu0
    %137 = vst [vmem:[#allocation2] sm:$0xff] %v107
    %138 = vst [vmem:[#allocation2 + $0x8] sm:$0xff] %v110
    %139 = vst [vmem:[#allocation2 + $0x10] sm:$0xff] %v115
    %140 = vst [vmem:[#allocation2 + $0x18] sm:$0xff] %v118
    %141 = vst [vmem:[#allocation2 + $0x20] sm:$0xff] %v123
    %142 = vst [vmem:[#allocation2 + $0x28] sm:$0xff] %v126
    %143 = vst [vmem:[#allocation2 + $0x30] sm:$0xff] %v131
    %144 = vst [vmem:[#allocation2 + $0x38] sm:$0xff] %v134
    // Predicated region
    $region14: #{tpu_custom_call.1} parent=1 // pred_check
      _
    $region15: #{tpu_custom_call.1} parent=1 // pred_check_branch
      %146 = sbr.rel (0) target = $region17
    $region16: #{tpu_custom_call.1} parent=1 // pred_region
      %s148 = ssub.s32 1024, 1024
      %149 = vsyncadd [#allocation3], %s148
      %s150 = sshll.u32 [#allocation2], 4
      %s151 = int_to_ptr.vmem [resolvable:$true] %s150
      %156 = dma.vmem_to_hbm [thread:$0]  %s151, 1024, %s3, [#allocation3], 128, 128, 8
    $region17: #{tpu_custom_call.1} parent=1 // pred_fallthru
      _
    // Predicated region
    $region18: #{tpu_custom_call.1} parent=1 // pred_check
      _
    $region19: #{tpu_custom_call.1} parent=1 // pred_check_branch
      %158 = sbr.rel (0) target = $region21
    $region20: #{tpu_custom_call.1} parent=1 // pred_region
      %159 = dma.done [#allocation3], 1024
    $region21: #{tpu_custom_call.1} parent=1 // pred_fallthru
      _
    %160 = vsyncpa [#allocation3], 1

</llo_original>
